<compile_context>
chip_gen: v7x
topology: tpu7x:2x2x1
jax: 0.10.0
libtpu: 0.0.40
codegen_flags: <defaults>
</compile_context>

<pallas_src>
import functools

import jax
import jax.numpy as jnp
from jax.experimental import pallas as pl
from jax.experimental.pallas import tpu as pltpu


OUT_PAD = 8  # fc3's 2 outputs padded to 8 lanes (masked vst is fine; stores
             # are not the binding slot, and this avoids 64x write blow-up)


def _round_up(x, m):
    return ((x + m - 1) // m) * m


def _mlp_kernel(x_ref, w1_ref, b1_ref, w2_ref, b2_ref, w3_ref, b3_ref, o_ref):
    # x arrives f32; cast to the weight dtype on-read (hidden under MXU work).
    x = x_ref[...].astype(w1_ref.dtype)
    # fc1 + relu (bf16 inputs, f32 accumulation on the MXU)
    h1 = jnp.dot(x, w1_ref[...], preferred_element_type=jnp.float32)
    h1 = jnp.maximum(h1 + b1_ref[...], 0.0)
    # fc2 + relu
    h2 = jnp.dot(h1.astype(w2_ref.dtype), w2_ref[...],
                 preferred_element_type=jnp.float32)
    h2 = jnp.maximum(h2 + b2_ref[...], 0.0)
    # TODO(synk): nn.Dropout is identity at inference time; training-mode
    # stochastic dropout (pltpu.prng_*) is intentionally not applied here.
    # fc3 (weight padded 2 -> OUT_PAD lanes; output stays f32)
    o = jnp.dot(h2.astype(w3_ref.dtype), w3_ref[...],
                preferred_element_type=jnp.float32) + b3_ref[...]
    o_ref[...] = o.astype(o_ref.dtype)


def pack_mlp_params(w1, b1, w2, b2, w3, b3, param_dtype=jnp.bfloat16):
    """One-time parameter packing (do NOT call per forward step).

    - casts weights to `param_dtype` (bf16 default; MXU accumulation stays f32)
    - zero-pads fc3 weight/bias from 2 -> OUT_PAD lanes
    - reshapes biases to (1, N) rows (kept f32) for clean VMEM broadcasting
    """
    hidden = w1.shape[1]
    n_out = w3.shape[1]
    w3p = jnp.zeros((hidden, OUT_PAD), dtype=w3.dtype).at[:, :n_out].set(w3)
    b3p = jnp.zeros((OUT_PAD,), dtype=b3.dtype).at[:n_out].set(b3)
    return {
        "w1": w1.astype(param_dtype),
        "w2": w2.astype(param_dtype),
        "w3": w3p.astype(param_dtype),
        "b1": b1.reshape(1, hidden).astype(jnp.float32),
        "b2": b2.reshape(1, hidden).astype(jnp.float32),
        "b3": b3p.reshape(1, OUT_PAD).astype(jnp.float32),
    }


@functools.partial(jax.jit, static_argnames=("tile_b",))
def mlp_length_regressor_forward(x, params, *, tile_b=512):
    """Fused fc1->relu->fc2->relu->fc3 forward.

    x:      (B, text_dim) float32 (cast to bf16 on-read inside the kernel)
    params: output of pack_mlp_params
    tile_b: batch tile; 512-1024 amortizes per-step pipeline overhead on all
            generations (v5e included -- bigger tiles just take more MXU
            passes; only shrink if a bundle dump shows exposed x-tile DMA).
    returns (B, 2) float32
    """
    w1, w2, w3 = params["w1"], params["w2"], params["w3"]
    b1, b2, b3 = params["b1"], params["b2"], params["b3"]

    B, text_dim = x.shape
    hidden = w1.shape[1]
    param_dtype = w1.dtype
    itemsize = jnp.dtype(param_dtype).itemsize

    # Clamp/align the batch tile and pad B so the grid divides evenly.
    # (Sublane constraint: tile_b multiple of 8. For tiny B this can drop to 8,
    # below bf16's 16-row packing -- legal, just partially-filled vregs.)
    tile_b = max(8, min(_round_up(tile_b, 8), _round_up(B, 8)))
    B_pad = _round_up(B, tile_b)
    xin = x
    if B_pad != B:
        # Padded rows produce nonzero garbage (bias leaks through the relus);
        # they are sliced off below -- never consume out_padded directly.
        xin = jnp.pad(xin, ((0, B_pad - B), (0, 0)))

    grid = (B_pad // tile_b,)

    cost = pl.CostEstimate(
        flops=2 * B_pad * (text_dim * hidden + hidden * hidden + hidden * OUT_PAD),
        transcendentals=0,
        bytes_accessed=(
            B_pad * text_dim * 4                               # x (f32)
            + (text_dim * hidden + hidden * hidden
               + hidden * OUT_PAD) * itemsize                  # weights (bf16)
            + (2 * hidden + OUT_PAD) * 4                       # biases (f32)
            + B_pad * OUT_PAD * 4                              # output (f32)
        ),
    )

    # Explicit scoped-VMEM budget: resident weights + double-buffered x/out
    # tiles + streaming h1/h2 intermediates + headroom.
    vmem_limit = (
        (text_dim * hidden + hidden * hidden + hidden * OUT_PAD) * itemsize
        + (2 * hidden + OUT_PAD) * 4
        + 2 * tile_b * text_dim * 4
        + 2 * tile_b * OUT_PAD * 4
        + 4 * tile_b * hidden * 4
        + (4 << 20)
    )
    vmem_limit = min(vmem_limit, 112 << 20)

    # Weights/biases: constant block index -> loaded once, kept resident;
    # single-buffered so no VMEM is wasted on a second copy.
    single = pl.Buffered(1)
    weight_specs = [
        pl.BlockSpec((text_dim, hidden), lambda i: (0, 0), pipeline_mode=single),
        pl.BlockSpec((1, hidden), lambda i: (0, 0), pipeline_mode=single),
        pl.BlockSpec((hidden, hidden), lambda i: (0, 0), pipeline_mode=single),
        pl.BlockSpec((1, hidden), lambda i: (0, 0), pipeline_mode=single),
        pl.BlockSpec((hidden, OUT_PAD), lambda i: (0, 0), pipeline_mode=single),
        pl.BlockSpec((1, OUT_PAD), lambda i: (0, 0), pipeline_mode=single),
    ]

    out_padded = pl.pallas_call(
        _mlp_kernel,
        out_shape=jax.ShapeDtypeStruct((B_pad, OUT_PAD), jnp.float32),
        grid_spec=pltpu.PrefetchScalarGridSpec(
            num_scalar_prefetch=0,
            grid=grid,
            in_specs=[pl.BlockSpec((tile_b, text_dim), lambda i: (i, 0))]
            + weight_specs,
            out_specs=pl.BlockSpec((tile_b, OUT_PAD), lambda i: (i, 0)),
        ),
        compiler_params=pltpu.CompilerParams(
            dimension_semantics=(pltpu.PARALLEL,),
            vmem_limit_bytes=int(vmem_limit),
        ),
        cost_estimate=cost,
    )(xin, w1, b1, w2, b2, w3, b3)

    return out_padded[:B, :2]


def _reference_forward(x, w1, b1, w2, b2, w3, b3, param_dtype=jnp.float32):
    """Pure-JAX reference, precision-matched to the kernel (bf16 weights/acts,
    f32 accumulation) when param_dtype=bf16."""
    xc = x.astype(param_dtype)
    h1 = jnp.dot(xc, w1.astype(param_dtype), preferred_element_type=jnp.float32)
    h1 = jnp.maximum(h1 + b1, 0.0).astype(param_dtype)
    h2 = jnp.dot(h1, w2.astype(param_dtype), preferred_element_type=jnp.float32)
    h2 = jnp.maximum(h2 + b2, 0.0).astype(param_dtype)
    o = jnp.dot(h2, w3.astype(param_dtype), preferred_element_type=jnp.float32)
    return o + b3


if __name__ == "__main__":
    # Small, deterministic synthetic shapes (module defaults hidden_dim=1024;
    # shrunk here for a quick test).
    B, text_dim, hidden = 8, 32, 128

    key = jax.random.PRNGKey(0)
    kx, k1, k2, k3, kb1, kb2, kb3 = jax.random.split(key, 7)

    x = jax.random.normal(kx, (B, text_dim), dtype=jnp.float32)

    # Deterministic parameter init (roughly Kaiming-uniform-ish scale).
    w1 = jax.random.normal(k1, (text_dim, hidden), dtype=jnp.float32) * (1.0 / jnp.sqrt(text_dim))
    b1 = jax.random.normal(kb1, (hidden,), dtype=jnp.float32) * 0.01
    w2 = jax.random.normal(k2, (hidden, hidden), dtype=jnp.float32) * (1.0 / jnp.sqrt(hidden))
    b2 = jax.random.normal(kb2, (hidden,), dtype=jnp.float32) * 0.01
    w3 = jax.random.normal(k3, (hidden, 2), dtype=jnp.float32) * (1.0 / jnp.sqrt(hidden))
    b3 = jax.random.normal(kb3, (2,), dtype=jnp.float32) * 0.01

    # One-time packing (bf16 weights, f32 accumulation inside the kernel).
    params = pack_mlp_params(w1, b1, w2, b2, w3, b3, param_dtype=jnp.bfloat16)

    out = mlp_length_regressor_forward(x, params)
    out = jax.block_until_ready(out)

    ref = _reference_forward(x, w1, b1, w2, b2, w3, b3, param_dtype=jnp.bfloat16)
    assert out.shape == (B, 2), out.shape
    assert jnp.allclose(out, ref, atol=1e-3, rtol=1e-3), (out, ref)

    print("KERNEL_OK")
</pallas_src>

<mosaic_0001>
module attributes {stable_mosaic.version = 11 : i64} {
  func.func @_mlp_kernel(%arg0: i32, %arg1: memref<8x32xf32, #tpu.memory_space<vmem>>, %arg2: memref<32x128xbf16, #tpu.memory_space<vmem>>, %arg3: memref<1x128xf32, #tpu.memory_space<vmem>>, %arg4: memref<128x128xbf16, #tpu.memory_space<vmem>>, %arg5: memref<1x128xf32, #tpu.memory_space<vmem>>, %arg6: memref<128x8xbf16, #tpu.memory_space<vmem>>, %arg7: memref<1x8xf32, #tpu.memory_space<vmem>>, %arg8: memref<8x8xf32, #tpu.memory_space<vmem>>) attributes {dimension_semantics = [#tpu.dimension_semantics<parallel>], iteration_bounds = array<i64: 1>, scalar_prefetch = 0 : i64, scratch_operands = 0 : i64, tpu.core_type = #tpu.core_type<tc>, window_params = [{transform_indices = @transform_0, window_bounds = array<i64: 8, 32>}, {pipeline_mode = #tpu.pipeline_mode<synchronous>, transform_indices = @transform_1, window_bounds = array<i64: 32, 128>}, {pipeline_mode = #tpu.pipeline_mode<synchronous>, transform_indices = @transform_2, window_bounds = array<i64: 1, 128>}, {pipeline_mode = #tpu.pipeline_mode<synchronous>, transform_indices = @transform_3, window_bounds = array<i64: 128, 128>}, {pipeline_mode = #tpu.pipeline_mode<synchronous>, transform_indices = @transform_4, window_bounds = array<i64: 1, 128>}, {pipeline_mode = #tpu.pipeline_mode<synchronous>, transform_indices = @transform_5, window_bounds = array<i64: 128, 8>}, {pipeline_mode = #tpu.pipeline_mode<synchronous>, transform_indices = @transform_6, window_bounds = array<i64: 1, 8>}, {transform_indices = @transform_7, window_bounds = array<i64: 8, 8>}]} {
    %c0 = arith.constant 0 : index
    %c0_0 = arith.constant 0 : index
    %0 = vector.load %arg1[%c0, %c0_0] : memref<8x32xf32, #tpu.memory_space<vmem>>, vector<8x32xf32>
    %1 = arith.truncf %0 : vector<8x32xf32> to vector<8x32xbf16>
    %c0_1 = arith.constant 0 : index
    %c0_2 = arith.constant 0 : index
    %2 = vector.load %arg2[%c0_1, %c0_2] : memref<32x128xbf16, #tpu.memory_space<vmem>>, vector<32x128xbf16>
    %cst = arith.constant dense<0.000000e+00> : vector<8x128xf32>
    %3 = tpu.matmul %1, %2, %cst {dimension_numbers = #tpu.dot_dimension_numbers<[1], [0], [0], [1], [0, 0, 1, 1], [], []>} : vector<8x32xbf16>, vector<32x128xbf16>, vector<8x128xf32> -> vector<8x128xf32>
    %c0_3 = arith.constant 0 : index
    %c0_4 = arith.constant 0 : index
    %4 = vector.load %arg3[%c0_3, %c0_4] : memref<1x128xf32, #tpu.memory_space<vmem>>, vector<1x128xf32>
    %5 = vector.broadcast %4 : vector<1x128xf32> to vector<8x128xf32>
    %6 = arith.addf %3, %5 : vector<8x128xf32>
    %cst_5 = arith.constant 0.000000e+00 : f32
    %7 = vector.broadcast %cst_5 : f32 to vector<8x128xf32>
    %8 = arith.maximumf %6, %7 : vector<8x128xf32>
    %9 = arith.truncf %8 : vector<8x128xf32> to vector<8x128xbf16>
    %c0_6 = arith.constant 0 : index
    %c0_7 = arith.constant 0 : index
    %10 = vector.load %arg4[%c0_6, %c0_7] : memref<128x128xbf16, #tpu.memory_space<vmem>>, vector<128x128xbf16>
    %cst_8 = arith.constant dense<0.000000e+00> : vector<8x128xf32>
    %11 = tpu.matmul %9, %10, %cst_8 {dimension_numbers = #tpu.dot_dimension_numbers<[1], [0], [0], [1], [0, 0, 1, 1], [], []>} : vector<8x128xbf16>, vector<128x128xbf16>, vector<8x128xf32> -> vector<8x128xf32>
    %c0_9 = arith.constant 0 : index
    %c0_10 = arith.constant 0 : index
    %12 = vector.load %arg5[%c0_9, %c0_10] : memref<1x128xf32, #tpu.memory_space<vmem>>, vector<1x128xf32>
    %13 = vector.broadcast %12 : vector<1x128xf32> to vector<8x128xf32>
    %14 = arith.addf %11, %13 : vector<8x128xf32>
    %cst_11 = arith.constant 0.000000e+00 : f32
    %15 = vector.broadcast %cst_11 : f32 to vector<8x128xf32>
    %16 = arith.maximumf %14, %15 : vector<8x128xf32>
    %17 = arith.truncf %16 : vector<8x128xf32> to vector<8x128xbf16>
    %c0_12 = arith.constant 0 : index
    %c0_13 = arith.constant 0 : index
    %18 = vector.load %arg6[%c0_12, %c0_13] : memref<128x8xbf16, #tpu.memory_space<vmem>>, vector<128x8xbf16>
    %cst_14 = arith.constant dense<0.000000e+00> : vector<8x8xf32>
    %19 = tpu.matmul %17, %18, %cst_14 {dimension_numbers = #tpu.dot_dimension_numbers<[1], [0], [0], [1], [0, 0, 1, 1], [], []>} : vector<8x128xbf16>, vector<128x8xbf16>, vector<8x8xf32> -> vector<8x8xf32>
    %c0_15 = arith.constant 0 : index
    %c0_16 = arith.constant 0 : index
    %20 = vector.load %arg7[%c0_15, %c0_16] : memref<1x8xf32, #tpu.memory_space<vmem>>, vector<1x8xf32>
    %21 = vector.broadcast %20 : vector<1x8xf32> to vector<8x8xf32>
    %22 = arith.addf %19, %21 : vector<8x8xf32>
    %c0_17 = arith.constant 0 : index
    %c0_18 = arith.constant 0 : index
    %23 = vector.load %arg8[%c0_17, %c0_18] : memref<8x8xf32, #tpu.memory_space<vmem>>, vector<8x8xf32>
    tpu.vector_store %arg8[%c0_17, %c0_18], %22 {strides = array<i32>} : memref<8x8xf32, #tpu.memory_space<vmem>>, vector<8x8xf32>,
    return
  }
  func.func @transform_0(%arg0: i32) -> (i32, i32) {
    %c0_i32 = arith.constant 0 : i32
    %c0_i32_0 = arith.constant 0 : i32
    return %arg0, %c0_i32 : i32, i32
  }
  func.func @transform_1(%arg0: i32) -> (i32, i32) {
    %c0_i32 = arith.constant 0 : i32
    %c0_i32_0 = arith.constant 0 : i32
    %c0_i32_1 = arith.constant 0 : i32
    return %c0_i32, %c0_i32_0 : i32, i32
  }
  func.func @transform_2(%arg0: i32) -> (i32, i32) {
    %c0_i32 = arith.constant 0 : i32
    %c0_i32_0 = arith.constant 0 : i32
    %c0_i32_1 = arith.constant 0 : i32
    return %c0_i32, %c0_i32_0 : i32, i32
  }
  func.func @transform_3(%arg0: i32) -> (i32, i32) {
    %c0_i32 = arith.constant 0 : i32
    %c0_i32_0 = arith.constant 0 : i32
    %c0_i32_1 = arith.constant 0 : i32
    return %c0_i32, %c0_i32_0 : i32, i32
  }
  func.func @transform_4(%arg0: i32) -> (i32, i32) {
    %c0_i32 = arith.constant 0 : i32
    %c0_i32_0 = arith.constant 0 : i32
    %c0_i32_1 = arith.constant 0 : i32
    return %c0_i32, %c0_i32_0 : i32, i32
  }
  func.func @transform_5(%arg0: i32) -> (i32, i32) {
    %c0_i32 = arith.constant 0 : i32
    %c0_i32_0 = arith.constant 0 : i32
    %c0_i32_1 = arith.constant 0 : i32
    return %c0_i32, %c0_i32_0 : i32, i32
  }
  func.func @transform_6(%arg0: i32) -> (i32, i32) {
    %c0_i32 = arith.constant 0 : i32
    %c0_i32_0 = arith.constant 0 : i32
    %c0_i32_1 = arith.constant 0 : i32
    return %c0_i32, %c0_i32_0 : i32, i32
  }
  func.func @transform_7(%arg0: i32) -> (i32, i32) {
    %c0_i32 = arith.constant 0 : i32
    %c0_i32_0 = arith.constant 0 : i32
    return %arg0, %c0_i32 : i32, i32
  }
}

</mosaic_0001>

<llo_original>
// kernel: mlp_length_regressor_forward.1
$region0: #{mlp_length_regressor_forward.1}
  #allocation0 [shape = 'u32[]', space=smem, size = 0x4, offset = 0x4, fixed_abs, tag = 'smem constant byte address 0x4 - core index']
  #allocation1 [shape = 'u32[144,128]{1,0:T(1,128)}', space=vmem, size = 0x12000, scoped, tag = 'internal scratch']
  %s0 = inlined_call_operand.hbm [shape: f32[8,32], index: 0, kind: input, shape index: {}]
  %s1 = inlined_call_operand.vmem [shape: bf16[32,128], index: 1, kind: input, shape index: {}]
  %s2 = inlined_call_operand.vmem [shape: f32[1,128], index: 2, kind: input, shape index: {}]
  %s3 = inlined_call_operand.vmem [shape: bf16[128,128], index: 3, kind: input, shape index: {}]
  %s4 = inlined_call_operand.vmem [shape: f32[1,128], index: 4, kind: input, shape index: {}]
  %s5 = inlined_call_operand.vmem [shape: bf16[128,8], index: 5, kind: input, shape index: {}]
  %s6 = inlined_call_operand.vmem [shape: f32[1,8], index: 6, kind: input, shape index: {}]
  %s7 = inlined_call_operand.vmem [shape: f32[8,8], index: 7, kind: output, shape index: {}]
  %s8 = sld [smem:[#allocation0]]
  $region42: #{mlp_length_regressor_forward.1} parent=0
    _
  %s10 = ssub.s32 1, %s8
  %s11 = scalar_select 0, %s10, %s8
  $region1: #{mlp_length_regressor_forward.1} parent=0
    #allocation2 [shape = 'u8[4096]{0}', space=vmem, size = 0x1000, scoped, tag = 'input window, operand 0, single buffered']
    #allocation3 [shape = 's32[1]{0}', space=sflag, size = 0x4, scoped, tag = 'scoped memory for mlp_length_regressor_forward.1']
    %12 = vsyncpa [#allocation3], 0
    // Predicated region
    $region2: #{mlp_length_regressor_forward.1} parent=1 // pred_check
      _
    $region3: #{mlp_length_regressor_forward.1} parent=1 // pred_check_branch
      %14 = sbr.rel (0) target = $region5
    $region4: #{mlp_length_regressor_forward.1} parent=1 // pred_region
      %s16 = ssub.s32 128, 128
      %17 = vsyncadd [#allocation3], %s16
      %s19 = sshll.u32 [#allocation2], 4
      %s20 = int_to_ptr.vmem [resolvable:$true] %s19
      %22 = dma.hbm_to_vmem [thread:$0]  %s0, 128, %s20, [#allocation3]
    $region5: #{mlp_length_regressor_forward.1} parent=1 // pred_fallthru
      _
    // Predicated region
    $region6: #{mlp_length_regressor_forward.1} parent=1 // pred_check
      _
    $region7: #{mlp_length_regressor_forward.1} parent=1 // pred_check_branch
      %24 = sbr.rel (0) target = $region9
    $region8: #{mlp_length_regressor_forward.1} parent=1 // pred_region
      _
    $region9: #{mlp_length_regressor_forward.1} parent=1 // pred_fallthru
      _
    // Predicated region
    $region10: #{mlp_length_regressor_forward.1} parent=1 // pred_check
      _
    $region11: #{mlp_length_regressor_forward.1} parent=1 // pred_check_branch
      %26 = sbr.rel (0) target = $region13
    $region12: #{mlp_length_regressor_forward.1} parent=1 // pred_region
      _
    $region13: #{mlp_length_regressor_forward.1} parent=1 // pred_fallthru
      _
    // Predicated region
    $region14: #{mlp_length_regressor_forward.1} parent=1 // pred_check
      _
    $region15: #{mlp_length_regressor_forward.1} parent=1 // pred_check_branch
      %28 = sbr.rel (0) target = $region17
    $region16: #{mlp_length_regressor_forward.1} parent=1 // pred_region
      _
    $region17: #{mlp_length_regressor_forward.1} parent=1 // pred_fallthru
      _
    // Predicated region
    $region18: #{mlp_length_regressor_forward.1} parent=1 // pred_check
      _
    $region19: #{mlp_length_regressor_forward.1} parent=1 // pred_check_branch
      %30 = sbr.rel (0) target = $region21
    $region20: #{mlp_length_regressor_forward.1} parent=1 // pred_region
      _
    $region21: #{mlp_length_regressor_forward.1} parent=1 // pred_fallthru
      _
    // Predicated region
    $region22: #{mlp_length_regressor_forward.1} parent=1 // pred_check
      _
    $region23: #{mlp_length_regressor_forward.1} parent=1 // pred_check_branch
      %32 = sbr.rel (0) target = $region25
    $region24: #{mlp_length_regressor_forward.1} parent=1 // pred_region
      _
    $region25: #{mlp_length_regressor_forward.1} parent=1 // pred_fallthru
      _
    // Predicated region
    $region26: #{mlp_length_regressor_forward.1} parent=1 // pred_check
      _
    $region27: #{mlp_length_regressor_forward.1} parent=1 // pred_check_branch
      %34 = sbr.rel (0) target = $region29
    $region28: #{mlp_length_regressor_forward.1} parent=1 // pred_region
      _
    $region29: #{mlp_length_regressor_forward.1} parent=1 // pred_fallthru
      _
    // Predicated region
    $region30: #{mlp_length_regressor_forward.1} parent=1 // pred_check
      _
    $region31: #{mlp_length_regressor_forward.1} parent=1 // pred_check_branch
      %36 = sbr.rel (0) target = $region33
    $region32: #{mlp_length_regressor_forward.1} parent=1 // pred_region
      %37 = dma.done [#allocation3], 128
    $region33: #{mlp_length_regressor_forward.1} parent=1 // pred_fallthru
      _
    %v39 = vld [vmem:[#allocation2] sm:$0xff]
    %v40 = vpack.c.bf16 %v39, %v39
    %v41 = vld [vmem:[%s1] sm:$0xf]
    %v42 = vld [vmem:[%s1 + $0x4] sm:$0xf]
    %v43 = vld [vmem:[%s1 + $0x8] sm:$0xf]
    %v44 = vld [vmem:[%s1 + $0xc] sm:$0xf]
    %v45 = vld [vmem:[%s2] sm:$0x1]
    %v47 = vlaneseq
    %v48 = vshrl.u32 %v47, 7
    %v49 = vsub.s32 0, %v48
    %v50 = vrot.slane %v45, %v49
    %v56 = vunpack.c.l.b16 %v41
    %v57 = vunpack.c.l.b16 %v42
    %v58 = vunpack.c.l.b16 %v43
    %v59 = vunpack.c.l.b16 %v44
    %v60 = vpack.c.b16 %v57, %v56
    %v61 = vpack.c.b16 %v59, %v58
    %vm64 = vcmask 261120
    %v66 = vsel %vm64, %v40, 0
    %68 = vmatprep.subr.bf16.mxu0 0
    %69 = vmatpush1.bf16.msra.mxu0 %v60
    %70 = vmatprep.subr.bf16.mxu0 0
    %71 = vmatpush1.bf16.msra.mxu0 %v61
    %72 = vmatprep.subr.bf16.mxu0 0
    %73 = vmatpush1.bf16.msra.mxu0 0
    %74 = vmatprep.subr.bf16.mxu0 0
    %75 = vmatpush1.bf16.msra.mxu0 0
    %76 = vmatprep.subr.bf16.mxu0 0
    %77 = vmatpush1.bf16.msra.mxu0 0
    %78 = vmatprep.subr.bf16.mxu0 0
    %79 = vmatpush1.bf16.msra.mxu0 0
    %80 = vmatprep.subr.bf16.mxu0 0
    %81 = vmatpush1.bf16.msra.mxu0 0
    %82 = vmatprep.subr.bf16.mxu0 0
    %83 = vmatpush1.bf16.msra.mxu0 0
    %84 = vmatprep.subr.bf16.mxu0 0
    %85 = vmatpush1.bf16.msra.mxu0 0
    %86 = vmatprep.subr.bf16.mxu0 0
    %87 = vmatpush1.bf16.msra.mxu0 0
    %88 = vmatprep.subr.bf16.mxu0 0
    %89 = vmatpush1.bf16.msra.mxu0 0
    %90 = vmatprep.subr.bf16.mxu0 0
    %91 = vmatpush1.bf16.msra.mxu0 0
    %92 = vmatprep.subr.bf16.mxu0 0
    %93 = vmatpush1.bf16.msra.mxu0 0
    %94 = vmatprep.subr.bf16.mxu0 0
    %95 = vmatpush1.bf16.msra.mxu0 0
    %96 = vmatprep.subr.bf16.mxu0 0
    %97 = vmatpush1.bf16.msra.mxu0 0
    %98 = vmatprep.subr.bf16.mxu0 0
    %99 = vmatpush1.bf16.msra.mxu0 0
    %100 = vmatprep.mubr.bf16.mxu0 0
    %101 = vmatmul.mubr.bf16.gmra.mrb[0].mxu0 %v66
    %v102 = vpop.f32.mrb[0].mxu0
    %v103 = vadd.f32 %v50, %v102
    %v104 = vpop.f32.mrb[0].mxu0
    %v105 = vpop.f32.mrb[0].mxu0
    %v106 = vpop.f32.mrb[0].mxu0
    %107 = vdwg.mxu0
    %v108 = vmax.f32 %v103, 0.0
    %v109 = vpack.c.bf16 %v108, %v108
    %v110 = vld [vmem:[%s3] sm:$0xf]
    %v111 = vld [vmem:[%s3 + $0x4] sm:$0xf]
    %v112 = vld [vmem:[%s3 + $0x8] sm:$0xf]
    %v113 = vld [vmem:[%s3 + $0xc] sm:$0xf]
    %v114 = vld [vmem:[%s3 + $0x10] sm:$0xf]
    %v115 = vld [vmem:[%s3 + $0x14] sm:$0xf]
    %v116 = vld [vmem:[%s3 + $0x18] sm:$0xf]
    %v117 = vld [vmem:[%s3 + $0x1c] sm:$0xf]
    %v118 = vld [vmem:[%s3 + $0x20] sm:$0xf]
    %v119 = vld [vmem:[%s3 + $0x24] sm:$0xf]
    %v120 = vld [vmem:[%s3 + $0x28] sm:$0xf]
    %v121 = vld [vmem:[%s3 + $0x2c] sm:$0xf]
    %v122 = vld [vmem:[%s3 + $0x30] sm:$0xf]
    %v123 = vld [vmem:[%s3 + $0x34] sm:$0xf]
    %v124 = vld [vmem:[%s3 + $0x38] sm:$0xf]
    %v125 = vld [vmem:[%s3 + $0x3c] sm:$0xf]
    %v126 = vld [vmem:[%s4] sm:$0x1]
    %v128 = vlaneseq
    %v129 = vshrl.u32 %v128, 7
    %v130 = vsub.s32 0, %v129
    %v131 = vrot.slane %v126, %v130
    %v149 = vunpack.c.l.b16 %v110
    %v150 = vunpack.c.l.b16 %v111
    %v151 = vunpack.c.l.b16 %v112
    %v152 = vunpack.c.l.b16 %v113
    %v153 = vunpack.c.l.b16 %v114
    %v154 = vunpack.c.l.b16 %v115
    %v155 = vunpack.c.l.b16 %v116
    %v156 = vunpack.c.l.b16 %v117
    %v157 = vunpack.c.l.b16 %v118
    %v158 = vunpack.c.l.b16 %v119
    %v159 = vunpack.c.l.b16 %v120
    %v160 = vunpack.c.l.b16 %v121
    %v161 = vunpack.c.l.b16 %v122
    %v162 = vunpack.c.l.b16 %v123
    %v163 = vunpack.c.l.b16 %v124
    %v164 = vunpack.c.l.b16 %v125
    %v165 = vpack.c.b16 %v150, %v149
    %v166 = vpack.c.b16 %v152, %v151
    %v167 = vpack.c.b16 %v154, %v153
    %v168 = vpack.c.b16 %v156, %v155
    %v169 = vpack.c.b16 %v158, %v157
    %v170 = vpack.c.b16 %v160, %v159
    %v171 = vpack.c.b16 %v162, %v161
    %v172 = vpack.c.b16 %v164, %v163
    %181 = vmatprep.subr.bf16.mxu0 0
    %182 = vmatpush1.bf16.msra.mxu0 %v165
    %183 = vmatprep.subr.bf16.mxu0 0
    %184 = vmatpush1.bf16.msra.mxu0 %v166
    %185 = vmatprep.subr.bf16.mxu0 0
    %186 = vmatpush1.bf16.msra.mxu0 %v167
    %187 = vmatprep.subr.bf16.mxu0 0
    %188 = vmatpush1.bf16.msra.mxu0 %v168
    %189 = vmatprep.subr.bf16.mxu0 0
    %190 = vmatpush1.bf16.msra.mxu0 %v169
    %191 = vmatprep.subr.bf16.mxu0 0
    %192 = vmatpush1.bf16.msra.mxu0 %v170
    %193 = vmatprep.subr.bf16.mxu0 0
    %194 = vmatpush1.bf16.msra.mxu0 %v171
    %195 = vmatprep.subr.bf16.mxu0 0
    %196 = vmatpush1.bf16.msra.mxu0 %v172
    %197 = vmatprep.subr.bf16.mxu0 0
    %198 = vmatpush1.bf16.msra.mxu0 0
    %199 = vmatprep.subr.bf16.mxu0 0
    %200 = vmatpush1.bf16.msra.mxu0 0
    %201 = vmatprep.subr.bf16.mxu0 0
    %202 = vmatpush1.bf16.msra.mxu0 0
    %203 = vmatprep.subr.bf16.mxu0 0
    %204 = vmatpush1.bf16.msra.mxu0 0
    %205 = vmatprep.subr.bf16.mxu0 0
    %206 = vmatpush1.bf16.msra.mxu0 0
    %207 = vmatprep.subr.bf16.mxu0 0
    %208 = vmatpush1.bf16.msra.mxu0 0
    %209 = vmatprep.subr.bf16.mxu0 0
    %210 = vmatpush1.bf16.msra.mxu0 0
    %211 = vmatprep.subr.bf16.mxu0 0
    %212 = vmatpush1.bf16.msra.mxu0 0
    %213 = vmatprep.mubr.bf16.mxu0 0
    %214 = vmatmul.mubr.bf16.gmra.mrb[0].mxu0 %v109
    %v215 = vpop.f32.mrb[0].mxu0
    %v216 = vadd.f32 %v131, %v215
    %v217 = vpop.f32.mrb[0].mxu0
    %v218 = vpop.f32.mrb[0].mxu0
    %v219 = vpop.f32.mrb[0].mxu0
    %220 = vdwg.mxu0
    %v221 = vmax.f32 %v216, 0.0
    %v222 = vpack.c.bf16 %v221, %v221
    %v223 = vld [vmem:[%s5] sm:$0xf]
    %v224 = vld [vmem:[%s5 + $0x4] sm:$0xf]
    %v225 = vld [vmem:[%s5 + $0x8] sm:$0xf]
    %v226 = vld [vmem:[%s5 + $0xc] sm:$0xf]
    %v227 = vld [vmem:[%s5 + $0x10] sm:$0xf]
    %v228 = vld [vmem:[%s5 + $0x14] sm:$0xf]
    %v229 = vld [vmem:[%s5 + $0x18] sm:$0xf]
    %v230 = vld [vmem:[%s5 + $0x1c] sm:$0xf]
    %v231 = vld [vmem:[%s5 + $0x20] sm:$0xf]
    %v232 = vld [vmem:[%s5 + $0x24] sm:$0xf]
    %v233 = vld [vmem:[%s5 + $0x28] sm:$0xf]
    %v234 = vld [vmem:[%s5 + $0x2c] sm:$0xf]
    %v235 = vld [vmem:[%s5 + $0x30] sm:$0xf]
    %v236 = vld [vmem:[%s5 + $0x34] sm:$0xf]
    %v237 = vld [vmem:[%s5 + $0x38] sm:$0xf]
    %v238 = vld [vmem:[%s5 + $0x3c] sm:$0xf]
    %v239 = vld [vmem:[%s6] sm:$0x1]
    %v241 = vlaneseq
    %v242 = vshrl.u32 %v241, 7
    %v243 = vsub.s32 0, %v242
    %v244 = vrot.slane %v239, %v243
    %v262 = vunpack.c.l.b16 %v223
    %v263 = vunpack.c.l.b16 %v224
    %v264 = vunpack.c.l.b16 %v225
    %v265 = vunpack.c.l.b16 %v226
    %v266 = vunpack.c.l.b16 %v227
    %v267 = vunpack.c.l.b16 %v228
    %v268 = vunpack.c.l.b16 %v229
    %v269 = vunpack.c.l.b16 %v230
    %v270 = vunpack.c.l.b16 %v231
    %v271 = vunpack.c.l.b16 %v232
    %v272 = vunpack.c.l.b16 %v233
    %v273 = vunpack.c.l.b16 %v234
    %v274 = vunpack.c.l.b16 %v235
    %v275 = vunpack.c.l.b16 %v236
    %v276 = vunpack.c.l.b16 %v237
    %v277 = vunpack.c.l.b16 %v238
    %v278 = vpack.c.b16 %v263, %v262
    %v279 = vpack.c.b16 %v265, %v264
    %v280 = vpack.c.b16 %v267, %v266
    %v281 = vpack.c.b16 %v269, %v268
    %v282 = vpack.c.b16 %v271, %v270
    %v283 = vpack.c.b16 %v273, %v272
    %v284 = vpack.c.b16 %v275, %v274
    %v285 = vpack.c.b16 %v277, %v276
    %294 = vmatprep.subr.bf16.mxu0 0
    %295 = vmatpush1.bf16.msra.mxu0 %v278
    %296 = vmatprep.subr.bf16.mxu0 0
    %297 = vmatpush1.bf16.msra.mxu0 %v279
    %298 = vmatprep.subr.bf16.mxu0 0
    %299 = vmatpush1.bf16.msra.mxu0 %v280
    %300 = vmatprep.subr.bf16.mxu0 0
    %301 = vmatpush1.bf16.msra.mxu0 %v281
    %302 = vmatprep.subr.bf16.mxu0 0
    %303 = vmatpush1.bf16.msra.mxu0 %v282
    %304 = vmatprep.subr.bf16.mxu0 0
    %305 = vmatpush1.bf16.msra.mxu0 %v283
    %306 = vmatprep.subr.bf16.mxu0 0
    %307 = vmatpush1.bf16.msra.mxu0 %v284
    %308 = vmatprep.subr.bf16.mxu0 0
    %309 = vmatpush1.bf16.msra.mxu0 %v285
    %310 = vmatprep.subr.bf16.mxu0 0
    %311 = vmatpush1.bf16.msra.mxu0 0
    %312 = vmatprep.subr.bf16.mxu0 0
    %313 = vmatpush1.bf16.msra.mxu0 0
    %314 = vmatprep.subr.bf16.mxu0 0
    %315 = vmatpush1.bf16.msra.mxu0 0
    %316 = vmatprep.subr.bf16.mxu0 0
    %317 = vmatpush1.bf16.msra.mxu0 0
    %318 = vmatprep.subr.bf16.mxu0 0
    %319 = vmatpush1.bf16.msra.mxu0 0
    %320 = vmatprep.subr.bf16.mxu0 0
    %321 = vmatpush1.bf16.msra.mxu0 0
    %322 = vmatprep.subr.bf16.mxu0 0
    %323 = vmatpush1.bf16.msra.mxu0 0
    %324 = vmatprep.subr.bf16.mxu0 0
    %325 = vmatpush1.bf16.msra.mxu0 0
    %326 = vmatprep.mubr.bf16.mxu0 0
    %327 = vmatmul.mubr.bf16.gmra.mrb[0].mxu0 %v222
    %v328 = vpop.f32.mrb[0].mxu0
    %v329 = vadd.f32 %v244, %v328
    %v330 = vpop.f32.mrb[0].mxu0
    %v331 = vpop.f32.mrb[0].mxu0
    %v332 = vpop.f32.mrb[0].mxu0
    %333 = vdwg.mxu0
    %vm334 = vcmask 64512
    %335 = vst.msk [vmem:[%s7] sm:$0xff] %vm334, %v329
    // Predicated region
    $region34: #{mlp_length_regressor_forward.1} parent=1 // pred_check
      _
    $region35: #{mlp_length_regressor_forward.1} parent=1 // pred_check_branch
      %337 = sbr.rel (0) target = $region37
    $region36: #{mlp_length_regressor_forward.1} parent=1 // pred_region
      _
    $region37: #{mlp_length_regressor_forward.1} parent=1 // pred_fallthru
      _
    // Predicated region
    $region38: #{mlp_length_regressor_forward.1} parent=1 // pred_check
      _
    $region39: #{mlp_length_regressor_forward.1} parent=1 // pred_check_branch
      %339 = sbr.rel (0) target = $region41
    $region40: #{mlp_length_regressor_forward.1} parent=1 // pred_region
      _
    $region41: #{mlp_length_regressor_forward.1} parent=1 // pred_fallthru
      _
    %340 = vsyncpa [#allocation3], 1

</llo_original>
